<compile_context>
chip_gen: v7x
topology: tpu7x:2x2x1
jax: 0.10.0
libtpu: 0.0.40
codegen_flags: <defaults>
</compile_context>

<pallas_src>
import jax
import jax.numpy as jnp
from jax.experimental import pallas as pl
from jax.experimental.pallas import tpu as pltpu

BN_EPS = 1e-5


def _channelwise_kernel(x_ref, w1_ref, b1_ref, w2_ref, b2_ref, o_ref, acc_ref):
    # x_ref: (Nb, C, HWblk) slab of the (zero-padded) input stream.
    hw = pl.program_id(1)

    @pl.when(hw == 0)
    def _():
        acc_ref[...] = jnp.zeros_like(acc_ref)

    # Global average pool as a running SUM over the spatial (lane) axis.
    # The 1/HW scale and the BatchNorm affine/bias are folded into w1/b1.
    acc_ref[...] += jnp.sum(x_ref[...].astype(jnp.float32), axis=2)

    @pl.when(hw == pl.num_programs(1) - 1)
    def _():
        # fc1 (1x1 conv == matmul) with BN+bias pre-folded, then ReLU.
        h = jnp.dot(acc_ref[...], w1_ref[...],
                    preferred_element_type=jnp.float32) + b1_ref[...]
        h = jnp.maximum(h, 0.0)
        # fc2 (1x1 conv == matmul).
        out = jnp.dot(h, w2_ref[...],
                      preferred_element_type=jnp.float32) + b2_ref[...]
        o_ref[...] = out.astype(o_ref.dtype)


def _round_up(x, m):
    return -(-x // m) * m


def _pick_tiles(n, c, hw, itemsize, target_block_bytes=2 << 20):
    """Pick (Nb, hw_blk): biggest lane-dense x slab around ~2 MiB per block."""
    hw_full = _round_up(hw, 128)              # lane-dense spatial width
    bytes_one = c * hw_full * itemsize        # one batch element, full HW
    if 8 * bytes_one <= target_block_bytes:
        # Full spatial extent fits: batch as many N as the target allows.
        hw_blk = hw_full
        nb = min(max(1, target_block_bytes // bytes_one), max(n, 1))
        nb = max(8, (nb // 8) * 8)            # sublane-aligned output rows
        # Prefer >=2 grid steps along N so both v7x TensorCores get work.
        while nb > 8 and -(-n // nb) < 2:
            nb = max(8, ((nb // 2) // 8) * 8)
    else:
        # Single image is large: keep Nb small and tile HW (reduction axis).
        nb = 8
        hw_blk = max(128, (target_block_bytes // (nb * c * itemsize)) // 128 * 128)
        hw_blk = min(hw_blk, hw_full)
    return nb, hw_blk


def channel_wise_forward(x, params):
    """x: (N, C, H, W) float32. Returns (N, C*M, 1, 1) to match PyTorch."""
    N, C, H, W = x.shape
    HW = H * W

    # --- Fold BN (inference), fc1 bias and the 1/HW mean into w1/b1 (free). ---
    inv_std = jax.lax.rsqrt(params["var"] + BN_EPS)           # (1, d)
    scale = params["gamma"] * inv_std                         # (1, d)
    w1_eff = (params["w1"] * scale) * (1.0 / HW)              # (C, d) column scale
    b1_eff = (params["b1"] - params["mu"]) * scale + params["beta"]  # (1, d)
    w2 = params["w2"]                                         # (d, C*M)
    b2 = params["b2"]                                         # (1, C*M)
    CM = w2.shape[1]

    itemsize = x.dtype.itemsize
    nb, hw_blk = _pick_tiles(N, C, HW, itemsize)

    HWp = _round_up(HW, hw_blk)
    Np = _round_up(N, nb)

    x_flat = x.reshape(N, C, HW)
    if HWp != HW or Np != N:
        # Zero padding is safe: spatial pad adds nothing to the sum (1/true-HW
        # already folded into w1); padded batch rows are sliced off below.
        x_flat = jnp.pad(x_flat, ((0, Np - N), (0, 0), (0, HWp - HW)))

    grid = (Np // nb, HWp // hw_blk)

    # VMEM sizing: double-buffered x slab dominates; keep a v7x-safe ceiling.
    vmem_need = 2 * nb * C * hw_blk * itemsize          # x double-buffer
    vmem_need += 2 * nb * CM * itemsize + nb * C * 4    # out + acc scratch
    for a in (w1_eff, b1_eff, w2, b2):
        vmem_need += 2 * a.size * a.dtype.itemsize
    vmem_limit = int(min(48 << 20, max(2 * vmem_need, 16 << 20)))

    full2d = lambda shape: pl.BlockSpec(shape, lambda n, h: (0, 0))

    out = pl.pallas_call(
        _channelwise_kernel,
        out_shape=jax.ShapeDtypeStruct((Np, CM), x.dtype),
        grid_spec=pltpu.PrefetchScalarGridSpec(
            num_scalar_prefetch=0,
            grid=grid,
            in_specs=[
                pl.BlockSpec((nb, C, hw_blk), lambda n, h: (n, 0, h)),  # x slab
                full2d(w1_eff.shape),   # folded fc1 weight
                full2d(b1_eff.shape),   # folded fc1 bias (BN included)
                full2d(w2.shape),       # fc2 weight
                full2d(b2.shape),       # fc2 bias
            ],
            out_specs=pl.BlockSpec((nb, CM), lambda n, h: (n, 0)),
            scratch_shapes=[pltpu.VMEM((nb, C), jnp.float32)],  # GAP partial sum
        ),
        compiler_params=pltpu.CompilerParams(
            dimension_semantics=("parallel", "arbitrary"),
            vmem_limit_bytes=vmem_limit),
    )(x_flat, w1_eff, b1_eff, w2, b2)

    return out[:N].reshape(N, CM, 1, 1)


def init_params(key, inplanes, M, d):
    """Deterministic synthetic parameters matching channelWise.__init__ shapes."""
    ks = jax.random.split(key, 8)
    # fc1: Conv2d(inplanes, d, 1x1) -> weight (d, inplanes, 1, 1); stored transposed (inplanes, d)
    w1 = 0.01 * jax.random.normal(ks[0], (inplanes, d), jnp.float32)
    b1 = 0.01 * jax.random.normal(ks[1], (1, d), jnp.float32)
    # BatchNorm2d(d) affine + running stats (inference mode)
    gamma = 1.0 + 0.1 * jax.random.normal(ks[2], (1, d), jnp.float32)
    beta = 0.1 * jax.random.normal(ks[3], (1, d), jnp.float32)
    mu = 0.05 * jax.random.normal(ks[4], (1, d), jnp.float32)
    var = jnp.abs(1.0 + 0.1 * jax.random.normal(ks[5], (1, d), jnp.float32))
    # fc2: Conv2d(d, inplanes*M, 1x1) -> weight (inplanes*M, d, 1, 1); stored transposed (d, inplanes*M)
    w2 = 0.01 * jax.random.normal(ks[6], (d, inplanes * M), jnp.float32)
    b2 = 0.01 * jax.random.normal(ks[7], (1, inplanes * M), jnp.float32)
    return dict(w1=w1, b1=b1, gamma=gamma, beta=beta, mu=mu, var=var, w2=w2, b2=b2)


def reference_forward(x, p):
    """Pure-JAX reference (unfused) for correctness checking."""
    gap = jnp.mean(x, axis=(2, 3))                           # (N, C)
    h = gap @ p["w1"] + p["b1"]
    h = (h - p["mu"]) * jax.lax.rsqrt(p["var"] + BN_EPS) * p["gamma"] + p["beta"]
    h = jnp.maximum(h, 0.0)
    out = h @ p["w2"] + p["b2"]
    return out[:, :, None, None]


if __name__ == "__main__":
    N, C, H, W = 2, 8, 16, 16   # batch, inplanes, spatial
    M, d = 2, 4                 # SK branches, bottleneck dim

    key = jax.random.PRNGKey(0)
    kx, kp = jax.random.split(key)
    x = jax.random.normal(kx, (N, C, H, W), jnp.float32)
    params = init_params(kp, C, M, d)

    out = channel_wise_forward(x, params)
    out = jax.block_until_ready(out)

    ref = reference_forward(x, params)
    assert out.shape == (N, C * M, 1, 1)
    assert jnp.allclose(out, ref, atol=1e-5, rtol=1e-5)

    print("KERNEL_OK")
</pallas_src>

<mosaic_0001>
module attributes {stable_mosaic.version = 11 : i64} {
  func.func @_channelwise_kernel(%arg0: i32, %arg1: i32, %arg2: memref<8x8x256xf32, #tpu.memory_space<vmem>>, %arg3: memref<8x4xf32, #tpu.memory_space<vmem>>, %arg4: memref<1x4xf32, #tpu.memory_space<vmem>>, %arg5: memref<4x16xf32, #tpu.memory_space<vmem>>, %arg6: memref<1x16xf32, #tpu.memory_space<vmem>>, %arg7: memref<8x16xf32, #tpu.memory_space<vmem>>, %arg8: memref<8x8xf32, #tpu.memory_space<vmem>>) attributes {dimension_semantics = [#tpu.dimension_semantics<parallel>, #tpu.dimension_semantics<arbitrary>], iteration_bounds = array<i64: 1, 1>, scalar_prefetch = 0 : i64, scratch_operands = 1 : i64, tpu.core_type = #tpu.core_type<tc>, window_params = [{transform_indices = @transform_0, window_bounds = array<i64: 8, 8, 256>}, {pipeline_mode = #tpu.pipeline_mode<synchronous>, transform_indices = @transform_1, window_bounds = array<i64: 8, 4>}, {pipeline_mode = #tpu.pipeline_mode<synchronous>, transform_indices = @transform_2, window_bounds = array<i64: 1, 4>}, {pipeline_mode = #tpu.pipeline_mode<synchronous>, transform_indices = @transform_3, window_bounds = array<i64: 4, 16>}, {pipeline_mode = #tpu.pipeline_mode<synchronous>, transform_indices = @transform_4, window_bounds = array<i64: 1, 16>}, {transform_indices = @transform_5, window_bounds = array<i64: 8, 16>}]} {
    %c0_i32 = arith.constant 0 : i32
    %0 = arith.cmpi eq, %arg1, %c0_i32 : i32
    %1 = arith.extui %0 : i1 to i32
    %c0_i32_0 = arith.constant 0 : i32
    %2 = arith.cmpi ne, %1, %c0_i32_0 : i32
    scf.if %2 {
      %cst_9 = arith.constant 0.000000e+00 : f32
      %11 = vector.broadcast %cst_9 : f32 to vector<8x8xf32>
      %c0_10 = arith.constant 0 : index
      %c0_11 = arith.constant 0 : index
      %12 = vector.load %arg8[%c0_10, %c0_11] : memref<8x8xf32, #tpu.memory_space<vmem>>, vector<8x8xf32>
      tpu.vector_store %arg8[%c0_10, %c0_11], %11 {strides = array<i32>} : memref<8x8xf32, #tpu.memory_space<vmem>>, vector<8x8xf32>,
    } else {
    }
    %c0 = arith.constant 0 : index
    %c0_1 = arith.constant 0 : index
    %3 = vector.load %arg8[%c0, %c0_1] : memref<8x8xf32, #tpu.memory_space<vmem>>, vector<8x8xf32>
    %c0_2 = arith.constant 0 : index
    %c0_3 = arith.constant 0 : index
    %c0_4 = arith.constant 0 : index
    %4 = vector.load %arg2[%c0_2, %c0_3, %c0_4] : memref<8x8x256xf32, #tpu.memory_space<vmem>>, vector<8x8x256xf32>
    %cst = arith.constant dense<0.000000e+00> : vector<8x8xf32>
    %5 = vector.multi_reduction <add>, %4, %cst [2] : vector<8x8x256xf32> to vector<8x8xf32>
    %6 = arith.addf %3, %5 : vector<8x8xf32>
    %c0_5 = arith.constant 0 : index
    %c0_6 = arith.constant 0 : index
    %7 = vector.load %arg8[%c0_5, %c0_6] : memref<8x8xf32, #tpu.memory_space<vmem>>, vector<8x8xf32>
    tpu.vector_store %arg8[%c0_5, %c0_6], %6 {strides = array<i32>} : memref<8x8xf32, #tpu.memory_space<vmem>>, vector<8x8xf32>,
    %c0_i32_7 = arith.constant 0 : i32
    %8 = arith.cmpi eq, %arg1, %c0_i32_7 : i32
    %9 = arith.extui %8 : i1 to i32
    %c0_i32_8 = arith.constant 0 : i32
    %10 = arith.cmpi ne, %9, %c0_i32_8 : i32
    scf.if %10 {
      %c0_9 = arith.constant 0 : index
      %c0_10 = arith.constant 0 : index
      %11 = vector.load %arg8[%c0_9, %c0_10] : memref<8x8xf32, #tpu.memory_space<vmem>>, vector<8x8xf32>
      %c0_11 = arith.constant 0 : index
      %c0_12 = arith.constant 0 : index
      %12 = vector.load %arg3[%c0_11, %c0_12] : memref<8x4xf32, #tpu.memory_space<vmem>>, vector<8x4xf32>
      %cst_13 = arith.constant dense<0.000000e+00> : vector<8x4xf32>
      %13 = tpu.matmul %11, %12, %cst_13 {dimension_numbers = #tpu.dot_dimension_numbers<[1], [0], [0], [1], [0, 0, 1, 1], [], []>} : vector<8x8xf32>, vector<8x4xf32>, vector<8x4xf32> -> vector<8x4xf32>
      %c0_14 = arith.constant 0 : index
      %c0_15 = arith.constant 0 : index
      %14 = vector.load %arg4[%c0_14, %c0_15] : memref<1x4xf32, #tpu.memory_space<vmem>>, vector<1x4xf32>
      %15 = vector.broadcast %14 : vector<1x4xf32> to vector<8x4xf32>
      %16 = arith.addf %13, %15 : vector<8x4xf32>
      %cst_16 = arith.constant 0.000000e+00 : f32
      %17 = vector.broadcast %cst_16 : f32 to vector<8x4xf32>
      %18 = arith.maximumf %16, %17 : vector<8x4xf32>
      %c0_17 = arith.constant 0 : index
      %c0_18 = arith.constant 0 : index
      %19 = vector.load %arg5[%c0_17, %c0_18] : memref<4x16xf32, #tpu.memory_space<vmem>>, vector<4x16xf32>
      %cst_19 = arith.constant dense<0.000000e+00> : vector<8x16xf32>
      %20 = tpu.matmul %18, %19, %cst_19 {dimension_numbers = #tpu.dot_dimension_numbers<[1], [0], [0], [1], [0, 0, 1, 1], [], []>} : vector<8x4xf32>, vector<4x16xf32>, vector<8x16xf32> -> vector<8x16xf32>
      %c0_20 = arith.constant 0 : index
      %c0_21 = arith.constant 0 : index
      %21 = vector.load %arg6[%c0_20, %c0_21] : memref<1x16xf32, #tpu.memory_space<vmem>>, vector<1x16xf32>
      %22 = vector.broadcast %21 : vector<1x16xf32> to vector<8x16xf32>
      %23 = arith.addf %20, %22 : vector<8x16xf32>
      %c0_22 = arith.constant 0 : index
      %c0_23 = arith.constant 0 : index
      %24 = vector.load %arg7[%c0_22, %c0_23] : memref<8x16xf32, #tpu.memory_space<vmem>>, vector<8x16xf32>
      tpu.vector_store %arg7[%c0_22, %c0_23], %23 {strides = array<i32>} : memref<8x16xf32, #tpu.memory_space<vmem>>, vector<8x16xf32>,
    } else {
    }
    return
  }
  func.func @transform_0(%arg0: i32, %arg1: i32) -> (i32, i32, i32) {
    %c0_i32 = arith.constant 0 : i32
    %c0_i32_0 = arith.constant 0 : i32
    return %arg0, %c0_i32, %arg1 : i32, i32, i32
  }
  func.func @transform_1(%arg0: i32, %arg1: i32) -> (i32, i32) {
    %c0_i32 = arith.constant 0 : i32
    %c0_i32_0 = arith.constant 0 : i32
    %c0_i32_1 = arith.constant 0 : i32
    return %c0_i32, %c0_i32_0 : i32, i32
  }
  func.func @transform_2(%arg0: i32, %arg1: i32) -> (i32, i32) {
    %c0_i32 = arith.constant 0 : i32
    %c0_i32_0 = arith.constant 0 : i32
    %c0_i32_1 = arith.constant 0 : i32
    return %c0_i32, %c0_i32_0 : i32, i32
  }
  func.func @transform_3(%arg0: i32, %arg1: i32) -> (i32, i32) {
    %c0_i32 = arith.constant 0 : i32
    %c0_i32_0 = arith.constant 0 : i32
    %c0_i32_1 = arith.constant 0 : i32
    return %c0_i32, %c0_i32_0 : i32, i32
  }
  func.func @transform_4(%arg0: i32, %arg1: i32) -> (i32, i32) {
    %c0_i32 = arith.constant 0 : i32
    %c0_i32_0 = arith.constant 0 : i32
    %c0_i32_1 = arith.constant 0 : i32
    return %c0_i32, %c0_i32_0 : i32, i32
  }
  func.func @transform_5(%arg0: i32, %arg1: i32) -> (i32, i32) {
    %c0_i32 = arith.constant 0 : i32
    %c0_i32_0 = arith.constant 0 : i32
    return %arg0, %c0_i32 : i32, i32
  }
}

</mosaic_0001>

<llo_original>
// kernel: tpu_custom_call.1
$region0: #{tpu_custom_call.1}
  #allocation0 [shape = 'u32[]', space=smem, size = 0x4, offset = 0x4, fixed_abs, tag = 'smem constant byte address 0x4 - core index']
  #allocation1 [shape = 'u32[144,128]{1,0:T(1,128)}', space=vmem, size = 0x12000, scoped, tag = 'internal scratch']
  #allocation2 [shape = 'f32[8,8]{1,0:T(8,128)}', space=vmem, size = 0x1000, scoped, tag = 'scratch operand']
  %s0 = inlined_call_operand.hbm [shape: f32[8,8,256], index: 0, kind: input, shape index: {}]
  %s1 = inlined_call_operand.vmem [shape: f32[8,4], index: 1, kind: input, shape index: {}]
  %s2 = inlined_call_operand.vmem [shape: f32[1,4], index: 2, kind: input, shape index: {}]
  %s3 = inlined_call_operand.vmem [shape: f32[4,16], index: 3, kind: input, shape index: {}]
  %s4 = inlined_call_operand.vmem [shape: f32[1,16], index: 4, kind: input, shape index: {}]
  %s5 = inlined_call_operand.hbm [shape: f32[8,16], index: 5, kind: output, shape index: {}]
  %s6 = sld [smem:[#allocation0]]
  $region42: #{tpu_custom_call.1} parent=0
    _
  %s8 = ssub.s32 1, %s6
  %s9 = scalar_select 0, %s8, %s6
  $region1: #{tpu_custom_call.1} parent=0
    #allocation3 [shape = 'u8[65536]{0}', space=vmem, size = 0x10000, scoped, tag = 'input window, operand 0, single buffered']
    #allocation4 [shape = 's32[1]{0}', space=sflag, size = 0x4, scoped, tag = 'scoped memory for tpu_custom_call.1']
    #allocation5 [shape = 's32[1]{0}', space=sflag, size = 0x4, scoped, tag = 'scoped memory for tpu_custom_call.1']
    #allocation6 [shape = 'u8[4096]{0}', space=vmem, size = 0x1000, scoped, tag = 'output window, operand 0, single buffered']
    %10 = vsyncpa [#allocation4], 0
    %11 = vsyncpa [#allocation5], 0
    // Predicated region
    $region2: #{tpu_custom_call.1} parent=1 // pred_check
      _
    $region3: #{tpu_custom_call.1} parent=1 // pred_check_branch
      %13 = sbr.rel (0) target = $region5
    $region4: #{tpu_custom_call.1} parent=1 // pred_region
      %s15 = ssub.s32 2048, 2048
      %16 = vsyncadd [#allocation4], %s15
      %s17 = sshll.u32 [#allocation3], 4
      %s18 = int_to_ptr.vmem [resolvable:$true] %s17
      %23 = dma.hbm_to_vmem [thread:$0]  %s0, 2048, %s18, [#allocation4], 256, 256, 16
    $region5: #{tpu_custom_call.1} parent=1 // pred_fallthru
      _
    // Predicated region
    $region6: #{tpu_custom_call.1} parent=1 // pred_check
      _
    $region7: #{tpu_custom_call.1} parent=1 // pred_check_branch
      %25 = sbr.rel (0) target = $region9
    $region8: #{tpu_custom_call.1} parent=1 // pred_region
      _
    $region9: #{tpu_custom_call.1} parent=1 // pred_fallthru
      _
    // Predicated region
    $region10: #{tpu_custom_call.1} parent=1 // pred_check
      _
    $region11: #{tpu_custom_call.1} parent=1 // pred_check_branch
      %27 = sbr.rel (0) target = $region13
    $region12: #{tpu_custom_call.1} parent=1 // pred_region
      _
    $region13: #{tpu_custom_call.1} parent=1 // pred_fallthru
      _
    // Predicated region
    $region14: #{tpu_custom_call.1} parent=1 // pred_check
      _
    $region15: #{tpu_custom_call.1} parent=1 // pred_check_branch
      %29 = sbr.rel (0) target = $region17
    $region16: #{tpu_custom_call.1} parent=1 // pred_region
      _
    $region17: #{tpu_custom_call.1} parent=1 // pred_fallthru
      _
    // Predicated region
    $region18: #{tpu_custom_call.1} parent=1 // pred_check
      _
    $region19: #{tpu_custom_call.1} parent=1 // pred_check_branch
      %31 = sbr.rel (0) target = $region21
    $region20: #{tpu_custom_call.1} parent=1 // pred_region
      _
    $region21: #{tpu_custom_call.1} parent=1 // pred_fallthru
      _
    // Predicated region
    $region22: #{tpu_custom_call.1} parent=1 // pred_check
      _
    $region23: #{tpu_custom_call.1} parent=1 // pred_check_branch
      %33 = sbr.rel (0) target = $region25
    $region24: #{tpu_custom_call.1} parent=1 // pred_region
      %34 = dma.done [#allocation4], 2048
    $region25: #{tpu_custom_call.1} parent=1 // pred_fallthru
      _
    %p35 = scmp.eq.s32.totalorder 0, 0
    // Predicated region
    $region26: #{tpu_custom_call.1} parent=1 // pred_check
      %p36 = pneg %p35
    $region27: #{tpu_custom_call.1} parent=1 // pred_check_branch
      %38 = sbr.rel (%p36) target = $region29
    $region28: #{tpu_custom_call.1} parent=1 // pred_region
      %vm39 = vcmask 64512
      %40 = vst.msk [vmem:[#allocation2] sm:$0xff] %vm39, 0.0
    $region29: #{tpu_custom_call.1} parent=1 // pred_fallthru
      _
    %v41 = vld [vmem:[#allocation2] sm:$0xff]
    %v42 = vld [vmem:[#allocation3] sm:$0xff]
    %v43 = vld [vmem:[#allocation3 + $0x8] sm:$0xff]
    %v44 = vld [vmem:[#allocation3 + $0x10] sm:$0xff]
    %v45 = vld [vmem:[#allocation3 + $0x18] sm:$0xff]
    %v46 = vld [vmem:[#allocation3 + $0x20] sm:$0xff]
    %v47 = vld [vmem:[#allocation3 + $0x28] sm:$0xff]
    %v48 = vld [vmem:[#allocation3 + $0x30] sm:$0xff]
    %v49 = vld [vmem:[#allocation3 + $0x38] sm:$0xff]
    %v50 = vld [vmem:[#allocation3 + $0x40] sm:$0xff]
    %v51 = vld [vmem:[#allocation3 + $0x48] sm:$0xff]
    %v52 = vld [vmem:[#allocation3 + $0x50] sm:$0xff]
    %v53 = vld [vmem:[#allocation3 + $0x58] sm:$0xff]
    %v54 = vld [vmem:[#allocation3 + $0x60] sm:$0xff]
    %v55 = vld [vmem:[#allocation3 + $0x68] sm:$0xff]
    %v56 = vld [vmem:[#allocation3 + $0x70] sm:$0xff]
    %v57 = vld [vmem:[#allocation3 + $0x78] sm:$0xff]
    %v58 = vadd.f32 %v42, %v43
    %59 = vadd.xlane.f32.xlu0 %v58
    %v60 = vpop.xlane.xlu0 %59
    %v61 = vadd.f32 %v44, %v45
    %62 = vadd.xlane.f32.xlu0 %v61
    %v63 = vpop.xlane.xlu0 %62
    %v64 = vadd.f32 %v46, %v47
    %65 = vadd.xlane.f32.xlu0 %v64
    %v66 = vpop.xlane.xlu0 %65
    %v67 = vadd.f32 %v48, %v49
    %68 = vadd.xlane.f32.xlu0 %v67
    %v69 = vpop.xlane.xlu0 %68
    %v70 = vadd.f32 %v50, %v51
    %71 = vadd.xlane.f32.xlu0 %v70
    %v72 = vpop.xlane.xlu0 %71
    %v73 = vadd.f32 %v52, %v53
    %74 = vadd.xlane.f32.xlu0 %v73
    %v75 = vpop.xlane.xlu0 %74
    %v76 = vadd.f32 %v54, %v55
    %77 = vadd.xlane.f32.xlu0 %v76
    %v78 = vpop.xlane.xlu0 %77
    %v79 = vadd.f32 %v56, %v57
    %80 = vadd.xlane.f32.xlu0 %v79
    %v81 = vpop.xlane.xlu0 %80
    %v90 = vlaneseq
    %v91 = vand.u32 %v90, 127
    %v92 = vlaneseq
    %v93 = vshrl.u32 %v92, 7
    %v94 = vsub.s32 %v91, %v93
    %v95 = vrot.slane %v60, %v94
    %v96 = vlaneseq
    %v97 = vshrl.u32 %v96, 7
    %v98 = vsub.s32 %v91, %v97
    %v99 = vrot.slane %v63, %v98
    %v100 = vlaneseq
    %v101 = vshrl.u32 %v100, 7
    %v102 = vsub.s32 %v91, %v101
    %v103 = vrot.slane %v66, %v102
    %v104 = vlaneseq
    %v105 = vshrl.u32 %v104, 7
    %v106 = vsub.s32 %v91, %v105
    %v107 = vrot.slane %v69, %v106
    %v108 = vlaneseq
    %v109 = vshrl.u32 %v108, 7
    %v110 = vsub.s32 %v91, %v109
    %v111 = vrot.slane %v72, %v110
    %v112 = vlaneseq
    %v113 = vshrl.u32 %v112, 7
    %v114 = vsub.s32 %v91, %v113
    %v115 = vrot.slane %v75, %v114
    %v116 = vlaneseq
    %v117 = vshrl.u32 %v116, 7
    %v118 = vsub.s32 %v91, %v117
    %v119 = vrot.slane %v78, %v118
    %v120 = vlaneseq
    %v121 = vshrl.u32 %v120, 7
    %v122 = vsub.s32 %v91, %v121
    %v123 = vrot.slane %v81, %v122
    %vm124 = vcmask 1041409
    %v125 = vsel %vm124, %v99, %v95
    %vm126 = vcmask 1042434
    %v127 = vsel %vm126, %v103, %v125
    %vm128 = vcmask 1043459
    %v129 = vsel %vm128, %v107, %v127
    %vm130 = vcmask 1044484
    %v131 = vsel %vm130, %v111, %v129
    %vm132 = vcmask 1045509
    %v133 = vsel %vm132, %v115, %v131
    %vm134 = vcmask 1046534
    %v135 = vsel %vm134, %v119, %v133
    %vm136 = vcmask 1047559
    %v137 = vsel %vm136, %v123, %v135
    %v139 = vadd.f32 %v41, %v137
    %vm140 = vcmask 64512
    %141 = vst.msk [vmem:[#allocation2] sm:$0xff] %vm140, %v139
    // Predicated region
    $region30: #{tpu_custom_call.1} parent=1 // pred_check
      %p142 = pneg %p35
    $region31: #{tpu_custom_call.1} parent=1 // pred_check_branch
      %144 = sbr.rel (%p142) target = $region33
    $region32: #{tpu_custom_call.1} parent=1 // pred_region
      %v145 = vld [vmem:[#allocation2] sm:$0xff]
      %v146 = vld [vmem:[%s1] sm:$0xff]
      %v147 = vld [vmem:[%s2] sm:$0x1]
      %v149 = vlaneseq
      %v150 = vshrl.u32 %v149, 7
      %v151 = vsub.s32 0, %v150
      %v152 = vrot.slane %v147, %v151
      %v155 = vsel %vm140, %v145, 0
      %157 = vmatprep.subr.mxu0 0.0
      %158 = vmatpush1.msra.mxu0 %v146
      %159 = vmatprep.subr.mxu0 0.0
      %160 = vmatpush1.msra.mxu0 0.0
      %161 = vmatprep.subr.mxu0 0.0
      %162 = vmatpush1.msra.mxu0 0.0
      %163 = vmatprep.subr.mxu0 0.0
      %164 = vmatpush1.msra.mxu0 0.0
      %165 = vmatprep.subr.mxu0 0.0
      %166 = vmatpush1.msra.mxu0 0.0
      %167 = vmatprep.subr.mxu0 0.0
      %168 = vmatpush1.msra.mxu0 0.0
      %169 = vmatprep.subr.mxu0 0.0
      %170 = vmatpush1.msra.mxu0 0.0
      %171 = vmatprep.subr.mxu0 0.0
      %172 = vmatpush1.msra.mxu0 0.0
      %173 = vmatprep.subr.mxu0 0.0
      %174 = vmatpush1.msra.mxu0 0.0
      %175 = vmatprep.subr.mxu0 0.0
      %176 = vmatpush1.msra.mxu0 0.0
      %177 = vmatprep.subr.mxu0 0.0
      %178 = vmatpush1.msra.mxu0 0.0
      %179 = vmatprep.subr.mxu0 0.0
      %180 = vmatpush1.msra.mxu0 0.0
      %181 = vmatprep.subr.mxu0 0.0
      %182 = vmatpush1.msra.mxu0 0.0
      %183 = vmatprep.subr.mxu0 0.0
      %184 = vmatpush1.msra.mxu0 0.0
      %185 = vmatprep.subr.mxu0 0.0
      %186 = vmatpush1.msra.mxu0 0.0
      %187 = vmatprep.subr.mxu0 0.0
      %188 = vmatpush1.msra.mxu0 0.0
      %189 = vmatprep.subr.mxu0 0.0
      %190 = vmatpush1.msra.mxu0 0.0
      %191 = vmatprep.subr.mxu0 0.0
      %192 = vmatpush1.msra.mxu0 0.0
      %193 = vmatprep.subr.mxu0 0.0
      %194 = vmatpush1.msra.mxu0 0.0
      %195 = vmatprep.subr.mxu0 0.0
      %196 = vmatpush1.msra.mxu0 0.0
      %197 = vmatprep.subr.mxu0 0.0
      %198 = vmatpush1.msra.mxu0 0.0
      %199 = vmatprep.subr.mxu0 0.0
      %200 = vmatpush1.msra.mxu0 0.0
      %201 = vmatprep.subr.mxu0 0.0
      %202 = vmatpush1.msra.mxu0 0.0
      %203 = vmatprep.subr.mxu0 0.0
      %204 = vmatpush1.msra.mxu0 0.0
      %205 = vmatprep.subr.mxu0 0.0
      %206 = vmatpush1.msra.mxu0 0.0
      %207 = vmatprep.subr.mxu0 0.0
      %208 = vmatpush1.msra.mxu0 0.0
      %209 = vmatprep.subr.mxu0 0.0
      %210 = vmatpush1.msra.mxu0 0.0
      %211 = vmatprep.subr.mxu0 0.0
      %212 = vmatpush1.msra.mxu0 0.0
      %213 = vmatprep.subr.mxu0 0.0
      %214 = vmatpush1.msra.mxu0 0.0
      %215 = vmatprep.subr.mxu0 0.0
      %216 = vmatpush1.msra.mxu0 0.0
      %217 = vmatprep.subr.mxu0 0.0
      %218 = vmatpush1.msra.mxu0 0.0
      %219 = vmatprep.subr.mxu0 0.0
      %220 = vmatpush1.msra.mxu0 0.0
      %221 = vmatprep.mubr.f32.mxu0 0.0
      %222 = vmatmul.mubr.f32.gmra.mrb[0].mxu0 %v155
      %v223 = vpop.f32.mrb[0].mxu0
      %v224 = vadd.f32 %v152, %v223
      %v225 = vpop.f32.mrb[0].mxu0
      %226 = vdwg.mxu0
      %v227 = vmax.f32 %v224, 0.0
      %v228 = vld [vmem:[%s3] sm:$0xf]
      %v229 = vld [vmem:[%s4] sm:$0x1]
      %v231 = vlaneseq
      %v232 = vshrl.u32 %v231, 7
      %v233 = vsub.s32 0, %v232
      %v234 = vrot.slane %v229, %v233
      %vm236 = vcmask 31744
      %v238 = vsel %vm236, %v227, 0
      %vm240 = vcmask 1043456
      %v242 = vsel %vm240, %v228, 0
      %244 = vmatprep.subr.mxu0 0.0
      %245 = vmatpush1.msra.mxu0 %v242
      %246 = vmatprep.subr.mxu0 0.0
      %247 = vmatpush1.msra.mxu0 0.0
      %248 = vmatprep.subr.mxu0 0.0
      %249 = vmatpush1.msra.mxu0 0.0
      %250 = vmatprep.subr.mxu0 0.0
      %251 = vmatpush1.msra.mxu0 0.0
      %252 = vmatprep.subr.mxu0 0.0
      %253 = vmatpush1.msra.mxu0 0.0
      %254 = vmatprep.subr.mxu0 0.0
      %255 = vmatpush1.msra.mxu0 0.0
      %256 = vmatprep.subr.mxu0 0.0
      %257 = vmatpush1.msra.mxu0 0.0
      %258 = vmatprep.subr.mxu0 0.0
      %259 = vmatpush1.msra.mxu0 0.0
      %260 = vmatprep.subr.mxu0 0.0
      %261 = vmatpush1.msra.mxu0 0.0
      %262 = vmatprep.subr.mxu0 0.0
      %263 = vmatpush1.msra.mxu0 0.0
      %264 = vmatprep.subr.mxu0 0.0
      %265 = vmatpush1.msra.mxu0 0.0
      %266 = vmatprep.subr.mxu0 0.0
      %267 = vmatpush1.msra.mxu0 0.0
      %268 = vmatprep.subr.mxu0 0.0
      %269 = vmatpush1.msra.mxu0 0.0
      %270 = vmatprep.subr.mxu0 0.0
      %271 = vmatpush1.msra.mxu0 0.0
      %272 = vmatprep.subr.mxu0 0.0
      %273 = vmatpush1.msra.mxu0 0.0
      %274 = vmatprep.subr.mxu0 0.0
      %275 = vmatpush1.msra.mxu0 0.0
      %276 = vmatprep.subr.mxu0 0.0
      %277 = vmatpush1.msra.mxu0 0.0
      %278 = vmatprep.subr.mxu0 0.0
      %279 = vmatpush1.msra.mxu0 0.0
      %280 = vmatprep.subr.mxu0 0.0
      %281 = vmatpush1.msra.mxu0 0.0
      %282 = vmatprep.subr.mxu0 0.0
      %283 = vmatpush1.msra.mxu0 0.0
      %284 = vmatprep.subr.mxu0 0.0
      %285 = vmatpush1.msra.mxu0 0.0
      %286 = vmatprep.subr.mxu0 0.0
      %287 = vmatpush1.msra.mxu0 0.0
      %288 = vmatprep.subr.mxu0 0.0
      %289 = vmatpush1.msra.mxu0 0.0
      %290 = vmatprep.subr.mxu0 0.0
      %291 = vmatpush1.msra.mxu0 0.0
      %292 = vmatprep.subr.mxu0 0.0
      %293 = vmatpush1.msra.mxu0 0.0
      %294 = vmatprep.subr.mxu0 0.0
      %295 = vmatpush1.msra.mxu0 0.0
      %296 = vmatprep.subr.mxu0 0.0
      %297 = vmatpush1.msra.mxu0 0.0
      %298 = vmatprep.subr.mxu0 0.0
      %299 = vmatpush1.msra.mxu0 0.0
      %300 = vmatprep.subr.mxu0 0.0
      %301 = vmatpush1.msra.mxu0 0.0
      %302 = vmatprep.subr.mxu0 0.0
      %303 = vmatpush1.msra.mxu0 0.0
      %304 = vmatprep.subr.mxu0 0.0
      %305 = vmatpush1.msra.mxu0 0.0
      %306 = vmatprep.subr.mxu0 0.0
      %307 = vmatpush1.msra.mxu0 0.0
      %308 = vmatprep.mubr.f32.mxu0 0.0
      %309 = vmatmul.mubr.f32.gmra.mrb[0].mxu0 %v238
      %v310 = vpop.f32.mrb[0].mxu0
      %v311 = vadd.f32 %v234, %v310
      %v312 = vpop.f32.mrb[0].mxu0
      %313 = vdwg.mxu0
      %vm314 = vcmask 130048
      %315 = vst.msk [vmem:[#allocation6] sm:$0xff] %vm314, %v311
    $region33: #{tpu_custom_call.1} parent=1 // pred_fallthru
      _
    // Predicated region
    $region34: #{tpu_custom_call.1} parent=1 // pred_check
      _
    $region35: #{tpu_custom_call.1} parent=1 // pred_check_branch
      %317 = sbr.rel (0) target = $region37
    $region36: #{tpu_custom_call.1} parent=1 // pred_region
      %s319 = ssub.s32 128, 128
      %320 = vsyncadd [#allocation5], %s319
      %s322 = sshll.u32 [#allocation6], 4
      %s323 = int_to_ptr.vmem [resolvable:$true] %s322
      %325 = dma.vmem_to_hbm [thread:$0]  %s323, 128, %s5, [#allocation5]
    $region37: #{tpu_custom_call.1} parent=1 // pred_fallthru
      _
    // Predicated region
    $region38: #{tpu_custom_call.1} parent=1 // pred_check
      _
    $region39: #{tpu_custom_call.1} parent=1 // pred_check_branch
      %327 = sbr.rel (0) target = $region41
    $region40: #{tpu_custom_call.1} parent=1 // pred_region
      %328 = dma.done [#allocation5], 128
    $region41: #{tpu_custom_call.1} parent=1 // pred_fallthru
      _
    %329 = vsyncpa [#allocation4], 1
    %330 = vsyncpa [#allocation5], 1

</llo_original>
